<compile_context>
chip_gen: v7x
topology: tpu7x:2x2x1
jax: 0.10.0
libtpu: 0.0.40
codegen_flags: <defaults>
</compile_context>

<pallas_src>
import math
import functools

import jax
import jax.numpy as jnp
from jax.experimental import pallas as pl
from jax.experimental.pallas import tpu as pltpu


_SQRT_2_OVER_PI = math.sqrt(2.0 / math.pi)
_INV_SQRT_2 = 1.0 / math.sqrt(2.0)


def _round_up(x, m):
    return ((x + m - 1) // m) * m


def _cdiv(a, b):
    return (a + b - 1) // b


def _gelu(h, exact):
    if exact:
        # exact-erf GELU: matches torch.nn.GELU() default.
        return 0.5 * h * (1.0 + jax.lax.erf(h * _INV_SQRT_2))
    # tanh-approx GELU: the transcendental runs on the otherwise-idle EUP slot
    # instead of an erf polynomial on the VALU slot (the saturating slot once
    # the kernel is MXU-bound).  Deviation from exact erf is ~1e-3.
    return 0.5 * h * (1.0 + jnp.tanh(_SQRT_2_OVER_PI * (h + 0.044715 * h * h * h)))


def _vmem_budget():
    """(scoped VMEM limit to request, physical VMEM capacity), in bytes."""
    cap = None
    try:
        cap = getattr(pltpu.get_tpu_info(), "vmem_capacity_bytes", None)
    except Exception:
        cap = None
    if not cap:
        cap = 64 * 1024 * 1024  # conservative fallback (v7x-sized)
    # >= 8 MiB headroom for Mosaic internal scratch, <= 85% of physical
    # (-> ~108 MiB on v5e/v6e's 128 MiB, ~54 MiB on v7x's 64 MiB).
    return int(min(cap - (8 << 20), (cap * 85) // 100)), int(cap)


# ----------------------------------------------------------------------------
# kernels
# ----------------------------------------------------------------------------
def _make_resident_kernel(n_k, tk4, exact_gelu, compute_dtype):
    """grid=(M_tiles,): x token tile + full VMEM-resident W1/W2; inner static
    loop over TK4-wide slabs of the 4H dim with an f32 VMEM accumulator."""

    def kernel(x_ref, w1_ref, b1_ref, w2_ref, b2_ref, o_ref, acc_ref):
        x = x_ref[...].astype(compute_dtype)          # per-tile cast, in-kernel
        for k in range(n_k):                          # static unroll; slices are views
            lo = k * tk4
            h = jnp.dot(x, w1_ref[:, lo:lo + tk4],
                        preferred_element_type=jnp.float32)
            h = h + b1_ref[:, lo:lo + tk4]            # f32 bias
            h = _gelu(h, exact_gelu)
            contrib = jnp.dot(h.astype(compute_dtype), w2_ref[lo:lo + tk4, :],
                              preferred_element_type=jnp.float32)
            if k == 0:
                acc_ref[...] = contrib
            else:
                acc_ref[...] += contrib
        # TODO(synk): training-mode dropout (p=config.dropout) would go here via
        # pltpu.prng_seed + pltpu.stateful_bernoulli; eval mode = identity.
        o_ref[...] = (acc_ref[...] + b2_ref[...]).astype(o_ref.dtype)

    return kernel


def _make_streamed_kernel(exact_gelu, compute_dtype):
    """grid=(M_tiles, K4_tiles): weight slabs streamed along the last
    (reduction) grid axis — fallback when W1+W2 do not fit in VMEM."""

    def kernel(x_ref, w1_ref, b1_ref, w2_ref, b2_ref, o_ref, acc_ref):
        k = pl.program_id(1)
        x = x_ref[...].astype(compute_dtype)
        h = jnp.dot(x, w1_ref[...], preferred_element_type=jnp.float32)
        h = _gelu(h + b1_ref[...], exact_gelu)
        contrib = jnp.dot(h.astype(compute_dtype), w2_ref[...],
                          preferred_element_type=jnp.float32)

        @pl.when(k == 0)
        def _():
            acc_ref[...] = contrib

        @pl.when(k > 0)
        def _():
            acc_ref[...] += contrib

        @pl.when(k == pl.num_programs(1) - 1)
        def _():
            o_ref[...] = (acc_ref[...] + b2_ref[...]).astype(o_ref.dtype)

    return kernel


# ----------------------------------------------------------------------------
# tiling / strategy selection
# ----------------------------------------------------------------------------
def _choose_tm(M, target):
    """Token-tile rows: multiple of 8, and >= 2 tiles whenever M allows so the
    'parallel' M axis load-balances across v7x's two TensorCores."""
    if M <= 8:
        return 8
    return max(8, min(target, _round_up(_cdiv(M, 2), 8)))


def _choose_tk4(H4, vmem_cap, override):
    if override is not None:
        tk4 = override
    else:
        # Lanes stay full (multiple of 128); smaller slab on small-VMEM chips
        # (v7x), since arithmetic intensity depends only on TM, not TK4.
        candidates = (512, 256, 128) if vmem_cap >= (96 << 20) else (256, 128)
        tk4 = next((c for c in candidates if H4 % c == 0), H4)
    assert H4 % tk4 == 0, "TK4 must divide 4*hidden_size"
    assert tk4 % 128 == 0 or tk4 == H4, \
        "TK4 must be a multiple of 128 lanes (or the full 4H dim)"
    return tk4


def _fits_resident(H, H4, tm, tk4, x_isize, out_isize, w_isize, vmem_limit):
    weights = 2 * 2 * H * H4 * w_isize                # W1+W2, double-buffered blocks
    biases = 2 * (H4 + H) * 4
    xio = 2 * tm * H * (x_isize + out_isize)          # double-buffered x & out blocks
    acc = tm * H * 4
    temps = 4 * tm * tk4 * 4                          # f32 GELU/matmul temporaries
    return weights + biases + xio + acc + temps <= vmem_limit - (4 << 20)


# ----------------------------------------------------------------------------
# public entry point
# ----------------------------------------------------------------------------
@functools.partial(
    jax.jit,
    static_argnames=("compute_dtype", "out_dtype", "tm", "tk4", "exact_gelu", "strategy"))
def bert_mlp(x, w1, b1, w2, b2, *, compute_dtype=jnp.bfloat16, out_dtype=None,
             tm=None, tk4=None, exact_gelu=False, strategy="auto"):
    """BertMLP forward (eval mode): dropout(linear2(gelu(linear1(x)))).

    x: (B, S, H).  w1: (H, 4H), w2: (4H, H) (in, out layout).  Pass bf16
    weights to avoid any cast pre-pass.  out_dtype defaults to x.dtype; pass
    jnp.bfloat16 to halve output HBM writes if downstream allows.
    """
    B, S, H = x.shape
    M = B * S
    H4 = w1.shape[1]
    assert w1.shape == (H, H4) and w2.shape == (H4, H)
    assert b1.size == H4 and b2.size == H
    out_dtype = x.dtype if out_dtype is None else out_dtype

    vmem_limit, vmem_cap = _vmem_budget()
    tk4 = _choose_tk4(H4, vmem_cap, tk4)
    w_isize = jnp.dtype(compute_dtype).itemsize

    # Strategy: keep W1/W2 fully VMEM-resident (DMA'd once) whenever they fit;
    # otherwise stream weight slabs with a large per-generation token tile.
    tm_resident = _choose_tm(M, tm if tm is not None else 512)
    if strategy == "resident":
        use_resident = True
    elif strategy == "streamed":
        use_resident = False
    else:
        use_resident = _fits_resident(
            H, H4, tm_resident, tk4, x.dtype.itemsize,
            jnp.dtype(out_dtype).itemsize, w_isize, vmem_limit)

    x2d = x.reshape(M, H)                     # no cast / no pad in the wrapper
    w1c = w1.astype(compute_dtype)            # no-op when weights already bf16
    w2c = w2.astype(compute_dtype)
    b1f = b1.reshape(1, H4).astype(jnp.float32)
    b2f = b2.reshape(1, H).astype(jnp.float32)

    if use_resident:
        TM = tm_resident
        grid = (_cdiv(M, TM),)                # ragged last tile -> masked stores
        kernel = _make_resident_kernel(H4 // tk4, tk4, exact_gelu, compute_dtype)
        in_specs = [
            pl.BlockSpec((TM, H), lambda m: (m, 0)),   # x token tile
            pl.BlockSpec((H, H4), lambda m: (0, 0)),   # W1: resident, DMA'd once
            pl.BlockSpec((1, H4), lambda m: (0, 0)),   # b1
            pl.BlockSpec((H4, H), lambda m: (0, 0)),   # W2: resident, DMA'd once
            pl.BlockSpec((1, H),  lambda m: (0, 0)),   # b2
        ]
        out_specs = pl.BlockSpec((TM, H), lambda m: (m, 0))
        dims = ("parallel",)
    else:
        # Streamed fallback (H too large for residency, e.g. H >~ 2048).
        tm_target = tm if tm is not None else (1024 if vmem_cap >= (96 << 20) else 512)
        TM = _choose_tm(M, tm_target)
        grid = (_cdiv(M, TM), H4 // tk4)      # reduction (4H) axis last
        kernel = _make_streamed_kernel(exact_gelu, compute_dtype)
        in_specs = [
            pl.BlockSpec((TM, H),  lambda m, k: (m, 0)),
            pl.BlockSpec((H, tk4), lambda m, k: (0, k)),
            pl.BlockSpec((1, tk4), lambda m, k: (0, k)),
            pl.BlockSpec((tk4, H), lambda m, k: (k, 0)),
            pl.BlockSpec((1, H),   lambda m, k: (0, 0)),
        ]
        out_specs = pl.BlockSpec((TM, H), lambda m, k: (m, 0))
        dims = ("parallel", "arbitrary")

    out = pl.pallas_call(
        kernel,
        out_shape=jax.ShapeDtypeStruct((M, H), out_dtype),
        grid_spec=pltpu.PrefetchScalarGridSpec(
            num_scalar_prefetch=0,
            grid=grid,
            in_specs=in_specs,
            out_specs=out_specs,
            scratch_shapes=[pltpu.VMEM((TM, H), jnp.float32)],
        ),
        compiler_params=pltpu.CompilerParams(
            dimension_semantics=dims,
            vmem_limit_bytes=vmem_limit,
        ),
    )(x2d, w1c, b1f, w2c, b2f)

    return out.reshape(B, S, H)


# ----------------------------------------------------------------------------
# params + reference
# ----------------------------------------------------------------------------
def init_params(key, hidden_size):
    """Deterministic init matching nn.Linear's U(-1/sqrt(fan_in), 1/sqrt(fan_in)).
    Stored as (in_features, out_features) so the kernel computes x @ W."""
    h, h4 = hidden_size, 4 * hidden_size
    k1, k2, k3, k4 = jax.random.split(key, 4)
    bound1 = 1.0 / math.sqrt(h)
    bound2 = 1.0 / math.sqrt(h4)
    w1 = jax.random.uniform(k1, (h, h4), jnp.float32, -bound1, bound1)
    b1 = jax.random.uniform(k2, (1, h4), jnp.float32, -bound1, bound1)
    w2 = jax.random.uniform(k3, (h4, h), jnp.float32, -bound2, bound2)
    b2 = jax.random.uniform(k4, (1, h), jnp.float32, -bound2, bound2)
    return w1, b1, w2, b2


def _reference(x, w1, b1, w2, b2, *, exact_gelu):
    B, S, H = x.shape
    h = x.reshape(-1, H) @ w1 + b1
    h = _gelu(h, exact_gelu)
    return (h @ w2 + b2).reshape(B, S, H)


if __name__ == "__main__":
    hidden_size = 32
    batch, seq = 2, 8

    key = jax.random.PRNGKey(0)
    kx, kp = jax.random.split(key)
    x = jax.random.normal(kx, (batch, seq, hidden_size), jnp.float32)
    w1, b1, w2, b2 = init_params(kp, hidden_size)
    # Store weights in the compute dtype once (as a real model would), so no
    # cast pre-pass runs in front of the kernel.
    w1c, w2c = w1.astype(jnp.bfloat16), w2.astype(jnp.bfloat16)

    # Default path: VMEM-resident weights + tanh-approx GELU.
    y = bert_mlp(x, w1c, b1, w2c, b2)
    jax.block_until_ready(y)
    y_ref = _reference(x, w1, b1, w2, b2, exact_gelu=False)
    assert jnp.allclose(y.astype(jnp.float32), y_ref, atol=2e-2, rtol=2e-2), \
        "mismatch vs reference (resident path)"

    # Streamed fallback path + exact-erf GELU (torch.nn.GELU parity).
    y2 = bert_mlp(x, w1c, b1, w2c, b2, strategy="streamed", exact_gelu=True)
    jax.block_until_ready(y2)
    y2_ref = _reference(x, w1, b1, w2, b2, exact_gelu=True)
    assert jnp.allclose(y2.astype(jnp.float32), y2_ref, atol=2e-2, rtol=2e-2), \
        "mismatch vs reference (streamed path)"

    print("KERNEL_OK")
</pallas_src>

<mosaic_0001>
module attributes {stable_mosaic.version = 11 : i64} {
  func.func @kernel(%arg0: i32, %arg1: memref<8x32xf32, #tpu.memory_space<vmem>>, %arg2: memref<32x128xbf16, #tpu.memory_space<vmem>>, %arg3: memref<1x128xf32, #tpu.memory_space<vmem>>, %arg4: memref<128x32xbf16, #tpu.memory_space<vmem>>, %arg5: memref<1x32xf32, #tpu.memory_space<vmem>>, %arg6: memref<8x32xf32, #tpu.memory_space<vmem>>, %arg7: memref<8x32xf32, #tpu.memory_space<vmem>>) attributes {dimension_semantics = [#tpu.dimension_semantics<parallel>], iteration_bounds = array<i64: 2>, scalar_prefetch = 0 : i64, scratch_operands = 1 : i64, tpu.core_type = #tpu.core_type<tc>, window_params = [{transform_indices = @transform_0, window_bounds = array<i64: 8, 32>}, {pipeline_mode = #tpu.pipeline_mode<synchronous>, transform_indices = @transform_1, window_bounds = array<i64: 32, 128>}, {pipeline_mode = #tpu.pipeline_mode<synchronous>, transform_indices = @transform_2, window_bounds = array<i64: 1, 128>}, {pipeline_mode = #tpu.pipeline_mode<synchronous>, transform_indices = @transform_3, window_bounds = array<i64: 128, 32>}, {pipeline_mode = #tpu.pipeline_mode<synchronous>, transform_indices = @transform_4, window_bounds = array<i64: 1, 32>}, {transform_indices = @transform_5, window_bounds = array<i64: 8, 32>}]} {
    %c0 = arith.constant 0 : index
    %c0_0 = arith.constant 0 : index
    %0 = vector.load %arg1[%c0, %c0_0] : memref<8x32xf32, #tpu.memory_space<vmem>>, vector<8x32xf32>
    %1 = arith.truncf %0 : vector<8x32xf32> to vector<8x32xbf16>
    %c0_1 = arith.constant 0 : index
    %c0_2 = arith.constant 0 : index
    %2 = vector.load %arg2[%c0_1, %c0_2] : memref<32x128xbf16, #tpu.memory_space<vmem>>, vector<32x128xbf16>
    %cst = arith.constant dense<0.000000e+00> : vector<8x128xf32>
    %3 = tpu.matmul %1, %2, %cst {dimension_numbers = #tpu.dot_dimension_numbers<[1], [0], [0], [1], [0, 0, 1, 1], [], []>} : vector<8x32xbf16>, vector<32x128xbf16>, vector<8x128xf32> -> vector<8x128xf32>
    %c0_3 = arith.constant 0 : index
    %c0_4 = arith.constant 0 : index
    %4 = vector.load %arg3[%c0_3, %c0_4] : memref<1x128xf32, #tpu.memory_space<vmem>>, vector<1x128xf32>
    %5 = vector.broadcast %4 : vector<1x128xf32> to vector<8x128xf32>
    %6 = arith.addf %3, %5 : vector<8x128xf32>
    %cst_5 = arith.constant 5.000000e-01 : f32
    %7 = vector.broadcast %cst_5 : f32 to vector<8x128xf32>
    %8 = arith.mulf %7, %6 : vector<8x128xf32>
    %cst_6 = arith.constant 4.471500e-02 : f32
    %9 = vector.broadcast %cst_6 : f32 to vector<8x128xf32>
    %10 = arith.mulf %9, %6 : vector<8x128xf32>
    %11 = arith.mulf %10, %6 : vector<8x128xf32>
    %12 = arith.mulf %11, %6 : vector<8x128xf32>
    %13 = arith.addf %6, %12 : vector<8x128xf32>
    %cst_7 = arith.constant 0.797884583 : f32
    %14 = vector.broadcast %cst_7 : f32 to vector<8x128xf32>
    %15 = arith.mulf %14, %13 : vector<8x128xf32>
    %16 = math.tanh %15 : vector<8x128xf32>
    %cst_8 = arith.constant 1.000000e+00 : f32
    %17 = vector.broadcast %cst_8 : f32 to vector<8x128xf32>
    %18 = arith.addf %17, %16 : vector<8x128xf32>
    %19 = arith.mulf %8, %18 : vector<8x128xf32>
    %20 = arith.truncf %19 : vector<8x128xf32> to vector<8x128xbf16>
    %c0_9 = arith.constant 0 : index
    %c0_10 = arith.constant 0 : index
    %21 = vector.load %arg4[%c0_9, %c0_10] : memref<128x32xbf16, #tpu.memory_space<vmem>>, vector<128x32xbf16>
    %cst_11 = arith.constant dense<0.000000e+00> : vector<8x32xf32>
    %22 = tpu.matmul %20, %21, %cst_11 {dimension_numbers = #tpu.dot_dimension_numbers<[1], [0], [0], [1], [0, 0, 1, 1], [], []>} : vector<8x128xbf16>, vector<128x32xbf16>, vector<8x32xf32> -> vector<8x32xf32>
    %c0_12 = arith.constant 0 : index
    %c0_13 = arith.constant 0 : index
    %23 = vector.load %arg7[%c0_12, %c0_13] : memref<8x32xf32, #tpu.memory_space<vmem>>, vector<8x32xf32>
    tpu.vector_store %arg7[%c0_12, %c0_13], %22 {strides = array<i32>} : memref<8x32xf32, #tpu.memory_space<vmem>>, vector<8x32xf32>,
    %c0_14 = arith.constant 0 : index
    %c0_15 = arith.constant 0 : index
    %24 = vector.load %arg7[%c0_14, %c0_15] : memref<8x32xf32, #tpu.memory_space<vmem>>, vector<8x32xf32>
    %c0_16 = arith.constant 0 : index
    %c0_17 = arith.constant 0 : index
    %25 = vector.load %arg5[%c0_16, %c0_17] : memref<1x32xf32, #tpu.memory_space<vmem>>, vector<1x32xf32>
    %26 = vector.broadcast %25 : vector<1x32xf32> to vector<8x32xf32>
    %27 = arith.addf %24, %26 : vector<8x32xf32>
    %c0_18 = arith.constant 0 : index
    %c0_19 = arith.constant 0 : index
    %28 = vector.load %arg6[%c0_18, %c0_19] : memref<8x32xf32, #tpu.memory_space<vmem>>, vector<8x32xf32>
    tpu.vector_store %arg6[%c0_18, %c0_19], %27 {strides = array<i32>} : memref<8x32xf32, #tpu.memory_space<vmem>>, vector<8x32xf32>,
    return
  }
  func.func @transform_0(%arg0: i32) -> (i32, i32) {
    %c0_i32 = arith.constant 0 : i32
    %c0_i32_0 = arith.constant 0 : i32
    return %arg0, %c0_i32 : i32, i32
  }
  func.func @transform_1(%arg0: i32) -> (i32, i32) {
    %c0_i32 = arith.constant 0 : i32
    %c0_i32_0 = arith.constant 0 : i32
    %c0_i32_1 = arith.constant 0 : i32
    return %c0_i32, %c0_i32_0 : i32, i32
  }
  func.func @transform_2(%arg0: i32) -> (i32, i32) {
    %c0_i32 = arith.constant 0 : i32
    %c0_i32_0 = arith.constant 0 : i32
    %c0_i32_1 = arith.constant 0 : i32
    return %c0_i32, %c0_i32_0 : i32, i32
  }
  func.func @transform_3(%arg0: i32) -> (i32, i32) {
    %c0_i32 = arith.constant 0 : i32
    %c0_i32_0 = arith.constant 0 : i32
    %c0_i32_1 = arith.constant 0 : i32
    return %c0_i32, %c0_i32_0 : i32, i32
  }
  func.func @transform_4(%arg0: i32) -> (i32, i32) {
    %c0_i32 = arith.constant 0 : i32
    %c0_i32_0 = arith.constant 0 : i32
    %c0_i32_1 = arith.constant 0 : i32
    return %c0_i32, %c0_i32_0 : i32, i32
  }
  func.func @transform_5(%arg0: i32) -> (i32, i32) {
    %c0_i32 = arith.constant 0 : i32
    %c0_i32_0 = arith.constant 0 : i32
    return %arg0, %c0_i32 : i32, i32
  }
}

</mosaic_0001>

<llo_original>
// kernel: bert_mlp.1
$region0: #{bert_mlp.1}
  #allocation0 [shape = 'u32[]', space=smem, size = 0x4, offset = 0x4, fixed_abs, tag = 'smem constant byte address 0x4 - core index']
  #allocation1 [shape = 'u32[144,128]{1,0:T(1,128)}', space=vmem, size = 0x12000, scoped, tag = 'internal scratch']
  #allocation2 [shape = 'f32[8,32]{1,0:T(8,128)}', space=vmem, size = 0x1000, scoped, tag = 'scratch operand']
  %s0 = inlined_call_operand.vmem [shape: f32[16,32], index: 0, kind: input, shape index: {}]
  %s1 = inlined_call_operand.vmem [shape: bf16[32,128], index: 1, kind: input, shape index: {}]
  %s2 = inlined_call_operand.vmem [shape: f32[1,128], index: 2, kind: input, shape index: {}]
  %s3 = inlined_call_operand.vmem [shape: bf16[128,32], index: 3, kind: input, shape index: {}]
  %s4 = inlined_call_operand.vmem [shape: f32[1,32], index: 4, kind: input, shape index: {}]
  %s5 = inlined_call_operand.hbm [shape: f32[16,32], index: 5, kind: output, shape index: {}]
  %s6 = sld [smem:[#allocation0]]
  $region53: #{bert_mlp.1} parent=0
    _
  %s8 = ssub.s32 1, %s6
  %s9 = scalar_select 0, %s8, %s6
  $region1: #{bert_mlp.1} parent=0
    #allocation3 [shape = 'u8[8192]{0}', space=vmem, size = 0x2000, scoped, tag = 'output window, operand 0']
    #allocation4 [shape = 's32[2]{0}', space=sflag, size = 0x8, scoped, tag = 'scoped memory for bert_mlp.1']
    %10 = vsyncpa [#allocation4], 0
    %s11 = scalar_lea.sflag [#allocation4], 1
    %12 = vsyncpa %s11, 0
    loop: start=0, step=1, limit=4
    $region2: #{bert_mlp.1} parent=1 // loop_pre_header
      _
    $region3: #{bert_mlp.1} parent=1 // loop_header
      %s14 = sphi 0, %s18
      %p15 = scmp.ge.s32.totalorder %s14, 4
      %s24 = sphi 0, %s26
      %s27 = sphi 0, %s24
      %s28 = sphi 0, %s27
      %s44 = sphi 0, %s28
      %s48 = sphi 0, %s48
      %s50 = sphi 0, %s48
      %s51 = sphi 0, %s50
      %s65 = sphi 0, %s51
      %s69 = sphi 0, %s69
      %s71 = sphi 0, %s69
      %s72 = sphi 0, %s71
      %s86 = sphi 0, %s72
      %s90 = sphi 0, %s90
      %s92 = sphi 0, %s90
      %s93 = sphi 0, %s92
      %s107 = sphi 0, %s93
      %s111 = sphi 0, %s111
      %s113 = sphi 0, %s111
      %s114 = sphi 0, %s113
      %s128 = sphi 0, %s114
      %s134 = sphi 0, %s136
      %s137 = sphi 0, %s134
      %s138 = sphi 0, %s137
      %s154 = sphi 0, %s138
    $region4: #{bert_mlp.1} parent=1 // loop_header_branch
      %17 = sbr.rel (%p15) target = $region8
    $region5: #{bert_mlp.1} parent=1 // loop_body
      %s19 = ssub.s32 %s14, 1
      %s20 = ssub.s32 %s14, 2
      %s21 = sadd.s32 %s14, 1
      %s22 = ssub.s32 %s14, %s21
      %p23 = scmp.eq.s32.totalorder %s22, 0
      %s25 = sadd.s32 %s24, 1
      %s26 = scalar_select %p23, %s24, %s25
      %p29 = pneg %p23
      %p30 = scmp.eq.s32.totalorder %s14, 1
      %p31 = por %p29, %p30
      %p32 = scmp.ne.s32.totalorder %s24, %s27
      %p33 = scmp.eq.s32.totalorder %s14, 0
      %p34 = por %p32, %p33
      %p35 = scmp.ne.s32.totalorder %s24, %s27
      %p36 = scmp.eq.s32.totalorder %s19, 1
      %p37 = por %p35, %p36
      %p38 = scmp.ne.s32.totalorder %s27, %s28
      %p39 = scmp.eq.s32.totalorder %s19, 0
      %p40 = por %p38, %p39
      %p41 = scmp.ne.s32.totalorder %s27, %s28
      %p42 = scmp.eq.s32.totalorder %s20, 1
      %p43 = por %p41, %p42
      %p45 = scmp.ne.s32.totalorder %s28, %s44
      %p46 = scmp.eq.s32.totalorder %s20, 0
      %p47 = por %p45, %p46
      %s49 = sadd.s32 %s48, 1
      %p52 = scmp.eq.s32.totalorder %s14, 1
      %p53 = scmp.ne.s32.totalorder %s48, %s50
      %p54 = scmp.eq.s32.totalorder %s14, 0
      %p55 = por %p53, %p54
      %p56 = scmp.ne.s32.totalorder %s48, %s50
      %p57 = scmp.eq.s32.totalorder %s19, 1
      %p58 = por %p56, %p57
      %p59 = scmp.ne.s32.totalorder %s50, %s51
      %p60 = scmp.eq.s32.totalorder %s19, 0
      %p61 = por %p59, %p60
      %p62 = scmp.ne.s32.totalorder %s50, %s51
      %p63 = scmp.eq.s32.totalorder %s20, 1
      %p64 = por %p62, %p63
      %p66 = scmp.ne.s32.totalorder %s51, %s65
      %p67 = scmp.eq.s32.totalorder %s20, 0
      %p68 = por %p66, %p67
      %s70 = sadd.s32 %s69, 1
      %p73 = scmp.eq.s32.totalorder %s14, 1
      %p74 = scmp.ne.s32.totalorder %s69, %s71
      %p75 = scmp.eq.s32.totalorder %s14, 0
      %p76 = por %p74, %p75
      %p77 = scmp.ne.s32.totalorder %s69, %s71
      %p78 = scmp.eq.s32.totalorder %s19, 1
      %p79 = por %p77, %p78
      %p80 = scmp.ne.s32.totalorder %s71, %s72
      %p81 = scmp.eq.s32.totalorder %s19, 0
      %p82 = por %p80, %p81
      %p83 = scmp.ne.s32.totalorder %s71, %s72
      %p84 = scmp.eq.s32.totalorder %s20, 1
      %p85 = por %p83, %p84
      %p87 = scmp.ne.s32.totalorder %s72, %s86
      %p88 = scmp.eq.s32.totalorder %s20, 0
      %p89 = por %p87, %p88
      %s91 = sadd.s32 %s90, 1
      %p94 = scmp.eq.s32.totalorder %s14, 1
      %p95 = scmp.ne.s32.totalorder %s90, %s92
      %p96 = scmp.eq.s32.totalorder %s14, 0
      %p97 = por %p95, %p96
      %p98 = scmp.ne.s32.totalorder %s90, %s92
      %p99 = scmp.eq.s32.totalorder %s19, 1
      %p100 = por %p98, %p99
      %p101 = scmp.ne.s32.totalorder %s92, %s93
      %p102 = scmp.eq.s32.totalorder %s19, 0
      %p103 = por %p101, %p102
      %p104 = scmp.ne.s32.totalorder %s92, %s93
      %p105 = scmp.eq.s32.totalorder %s20, 1
      %p106 = por %p104, %p105
      %p108 = scmp.ne.s32.totalorder %s93, %s107
      %p109 = scmp.eq.s32.totalorder %s20, 0
      %p110 = por %p108, %p109
      %s112 = sadd.s32 %s111, 1
      %p115 = scmp.eq.s32.totalorder %s14, 1
      %p116 = scmp.ne.s32.totalorder %s111, %s113
      %p117 = scmp.eq.s32.totalorder %s14, 0
      %p118 = por %p116, %p117
      %p119 = scmp.ne.s32.totalorder %s111, %s113
      %p120 = scmp.eq.s32.totalorder %s19, 1
      %p121 = por %p119, %p120
      %p122 = scmp.ne.s32.totalorder %s113, %s114
      %p123 = scmp.eq.s32.totalorder %s19, 0
      %p124 = por %p122, %p123
      %p125 = scmp.ne.s32.totalorder %s113, %s114
      %p126 = scmp.eq.s32.totalorder %s20, 1
      %p127 = por %p125, %p126
      %p129 = scmp.ne.s32.totalorder %s114, %s128
      %p130 = scmp.eq.s32.totalorder %s20, 0
      %p131 = por %p129, %p130
      %s132 = ssub.s32 %s14, %s21
      %p133 = scmp.eq.s32.totalorder %s132, 0
      %s135 = sadd.s32 %s134, 1
      %s136 = scalar_select %p133, %s134, %s135
      %p139 = pneg %p133
      %p140 = scmp.eq.s32.totalorder %s14, 1
      %p141 = por %p139, %p140
      %p142 = scmp.ne.s32.totalorder %s134, %s137
      %p143 = scmp.eq.s32.totalorder %s14, 0
      %p144 = por %p142, %p143
      %p145 = scmp.ne.s32.totalorder %s134, %s137
      %p146 = scmp.eq.s32.totalorder %s19, 1
      %p147 = por %p145, %p146
      %p148 = scmp.ne.s32.totalorder %s137, %s138
      %p149 = scmp.eq.s32.totalorder %s19, 0
      %p150 = por %p148, %p149
      %p151 = scmp.ne.s32.totalorder %s137, %s138
      %p152 = scmp.eq.s32.totalorder %s20, 1
      %p153 = por %p151, %p152
      %p155 = scmp.ne.s32.totalorder %s138, %s154
      %p156 = scmp.eq.s32.totalorder %s20, 0
      %p157 = por %p155, %p156
      %p158 = scmp.le.s32.totalorder 1, %s14
      %p159 = scmp.lt.s32.totalorder %s14, 3
      %p160 = pnand %p158, %p159
      %p161 = pneg %p160
      // Predicated region
      $region9: #{bert_mlp.1} parent=5 // pred_check
        _
      $region10: #{bert_mlp.1} parent=5 // pred_check_branch
        %163 = sbr.rel (%p160) target = $region12
      $region11: #{bert_mlp.1} parent=5 // pred_region
        %s164 = ssub.s32 %s14, 1
        // Predicated region
        $region13: #{bert_mlp.1} parent=11 // pred_check
          %p165 = pneg %p61
        $region14: #{bert_mlp.1} parent=11 // pred_check_branch
          %167 = sbr.rel (%p165) target = $region16
        $region15: #{bert_mlp.1} parent=11 // pred_region
          _
        $region16: #{bert_mlp.1} parent=11 // pred_fallthru
          _
        // Predicated region
        $region17: #{bert_mlp.1} parent=11 // pred_check
          %p168 = pneg %p82
        $region18: #{bert_mlp.1} parent=11 // pred_check_branch
          %170 = sbr.rel (%p168) target = $region20
        $region19: #{bert_mlp.1} parent=11 // pred_region
          _
        $region20: #{bert_mlp.1} parent=11 // pred_fallthru
          _
        // Predicated region
        $region21: #{bert_mlp.1} parent=11 // pred_check
          %p171 = pneg %p103
        $region22: #{bert_mlp.1} parent=11 // pred_check_branch
          %173 = sbr.rel (%p171) target = $region24
        $region23: #{bert_mlp.1} parent=11 // pred_region
          _
        $region24: #{bert_mlp.1} parent=11 // pred_fallthru
          _
        // Predicated region
        $region25: #{bert_mlp.1} parent=11 // pred_check
          %p174 = pneg %p124
        $region26: #{bert_mlp.1} parent=11 // pred_check_branch
          %176 = sbr.rel (%p174) target = $region28
        $region27: #{bert_mlp.1} parent=11 // pred_region
          _
        $region28: #{bert_mlp.1} parent=11 // pred_fallthru
          _
      $region12: #{bert_mlp.1} parent=5 // pred_fallthru
        _
      %p177 = scmp.lt.s32.totalorder %s14, 2
      // Predicated region
      $region29: #{bert_mlp.1} parent=5 // pred_check
        %p178 = pneg %p177
      $region30: #{bert_mlp.1} parent=5 // pred_check_branch
        %180 = sbr.rel (%p178) target = $region32
      $region31: #{bert_mlp.1} parent=5 // pred_region
        // Predicated region
        $region33: #{bert_mlp.1} parent=31 // pred_check
          %p181 = pneg %p34
        $region34: #{bert_mlp.1} parent=31 // pred_check_branch
          %183 = sbr.rel (%p181) target = $region36
        $region35: #{bert_mlp.1} parent=31 // pred_region
          %p184 = scmp.lt.s32.totalorder %s14, 1
          %s185 = scalar_select %p184, %s14, 1
          %s186 = smul.addr %s185, 8
          %s187 = scalar_lea.vmem %s0, %s186
        $region36: #{bert_mlp.1} parent=31 // pred_fallthru
          _
      $region32: #{bert_mlp.1} parent=5 // pred_fallthru
        _
      %p188 = scmp.le.s32.totalorder 1, %s14
      %p189 = scmp.lt.s32.totalorder %s14, 3
      %p190 = pnand %p188, %p189
      %p191 = pneg %p190
      // Predicated region
      $region37: #{bert_mlp.1} parent=5 // pred_check
        _
      $region38: #{bert_mlp.1} parent=5 // pred_check_branch
        %193 = sbr.rel (%p190) target = $region40
      $region39: #{bert_mlp.1} parent=5 // pred_region
        %s194 = ssub.s32 %s14, 1
        %p195 = scmp.lt.s32.totalorder %s19, 1
        %s196 = scalar_select %p195, %s19, 1
        %s197 = smul.addr %s196, 8
        %s198 = scalar_lea.vmem %s0, %s197
        %p199 = pneg %p40
        %p200 = pneg %p37
        %p201 = pneg %p61
        %p202 = pneg %p58
        %p203 = pneg %p82
        %p204 = pneg %p79
        %p205 = pneg %p103
        %p206 = pneg %p100
        %p207 = pneg %p124
        %p208 = pneg %p121
        %p209 = pneg %p150
        %p210 = pneg %p147
        %s211 = sand.u32 %s137, 1
        %s212 = scalar_lea.sflag [#allocation4], %s211
        %s213 = sand.u32 %s137, 1
        %s214 = smul.addr %s213, 8
        %s215 = scalar_lea.vmem [#allocation3], %s214
        %p216 = scmp.lt.s32.totalorder %s19, 1
        %s217 = scalar_select %p216, %s19, 1
        %s218 = smul.addr %s217, 8
        %s219 = scalar_lea.vmem %s0, %s218
        %v221 = vld [vmem:[%s219] sm:$0xff]
        %v222 = vpack.c.bf16 %v221, %v221
        %v223 = vld [vmem:[%s1] sm:$0xf]
        %v224 = vld [vmem:[%s1 + $0x4] sm:$0xf]
        %v225 = vld [vmem:[%s1 + $0x8] sm:$0xf]
        %v226 = vld [vmem:[%s1 + $0xc] sm:$0xf]
        %v227 = vld [vmem:[%s2] sm:$0x1]
        %v229 = vlaneseq
        %v230 = vshrl.u32 %v229, 7
        %v231 = vsub.s32 0, %v230
        %v232 = vrot.slane %v227, %v231
        %v238 = vunpack.c.l.b16 %v223
        %v239 = vunpack.c.l.b16 %v224
        %v240 = vunpack.c.l.b16 %v225
        %v241 = vunpack.c.l.b16 %v226
        %v242 = vpack.c.b16 %v239, %v238
        %v243 = vpack.c.b16 %v241, %v240
        %vm246 = vcmask 261120
        %v248 = vsel %vm246, %v222, 0
        %250 = vmatprep.subr.bf16.mxu0 0
        %251 = vmatpush1.bf16.msra.mxu0 %v242
        %252 = vmatprep.subr.bf16.mxu0 0
        %253 = vmatpush1.bf16.msra.mxu0 %v243
        %254 = vmatprep.subr.bf16.mxu0 0
        %255 = vmatpush1.bf16.msra.mxu0 0
        %256 = vmatprep.subr.bf16.mxu0 0
        %257 = vmatpush1.bf16.msra.mxu0 0
        %258 = vmatprep.subr.bf16.mxu0 0
        %259 = vmatpush1.bf16.msra.mxu0 0
        %260 = vmatprep.subr.bf16.mxu0 0
        %261 = vmatpush1.bf16.msra.mxu0 0
        %262 = vmatprep.subr.bf16.mxu0 0
        %263 = vmatpush1.bf16.msra.mxu0 0
        %264 = vmatprep.subr.bf16.mxu0 0
        %265 = vmatpush1.bf16.msra.mxu0 0
        %266 = vmatprep.subr.bf16.mxu0 0
        %267 = vmatpush1.bf16.msra.mxu0 0
        %268 = vmatprep.subr.bf16.mxu0 0
        %269 = vmatpush1.bf16.msra.mxu0 0
        %270 = vmatprep.subr.bf16.mxu0 0
        %271 = vmatpush1.bf16.msra.mxu0 0
        %272 = vmatprep.subr.bf16.mxu0 0
        %273 = vmatpush1.bf16.msra.mxu0 0
        %274 = vmatprep.subr.bf16.mxu0 0
        %275 = vmatpush1.bf16.msra.mxu0 0
        %276 = vmatprep.subr.bf16.mxu0 0
        %277 = vmatpush1.bf16.msra.mxu0 0
        %278 = vmatprep.subr.bf16.mxu0 0
        %279 = vmatpush1.bf16.msra.mxu0 0
        %280 = vmatprep.subr.bf16.mxu0 0
        %281 = vmatpush1.bf16.msra.mxu0 0
        %282 = vmatprep.mubr.bf16.mxu0 0
        %283 = vmatmul.mubr.bf16.gmra.mrb[0].mxu0 %v248
        %v284 = vpop.f32.mrb[0].mxu0
        %v285 = vadd.f32 %v232, %v284
        %v286 = vpop.f32.mrb[0].mxu0
        %v287 = vpop.f32.mrb[0].mxu0
        %v288 = vpop.f32.mrb[0].mxu0
        %289 = vdwg.mxu0
        %v290 = vmul.f32 %v285, 0.5
        %v291 = vmul.f32 %v285, 0.044715
        %v292 = vmul.f32 %v291, %v285
        %v293 = vmul.f32 %v292, %v285
        %v294 = vadd.f32 %v285, %v293
        %v295 = vmul.f32 %v294, 0.7978846
        %v296 = vtanh.pop %v295
        %v297 = vadd.f32 %v296, 1.0
        %v298 = vmul.f32 %v290, %v297
        %v299 = vpack.c.bf16 %v298, %v298
        %v300 = vld [vmem:[%s3] sm:$0xf]
        %v301 = vld [vmem:[%s3 + $0x4] sm:$0xf]
        %v302 = vld [vmem:[%s3 + $0x8] sm:$0xf]
        %v303 = vld [vmem:[%s3 + $0xc] sm:$0xf]
        %v304 = vld [vmem:[%s3 + $0x10] sm:$0xf]
        %v305 = vld [vmem:[%s3 + $0x14] sm:$0xf]
        %v306 = vld [vmem:[%s3 + $0x18] sm:$0xf]
        %v307 = vld [vmem:[%s3 + $0x1c] sm:$0xf]
        %v308 = vld [vmem:[%s3 + $0x20] sm:$0xf]
        %v309 = vld [vmem:[%s3 + $0x24] sm:$0xf]
        %v310 = vld [vmem:[%s3 + $0x28] sm:$0xf]
        %v311 = vld [vmem:[%s3 + $0x2c] sm:$0xf]
        %v312 = vld [vmem:[%s3 + $0x30] sm:$0xf]
        %v313 = vld [vmem:[%s3 + $0x34] sm:$0xf]
        %v314 = vld [vmem:[%s3 + $0x38] sm:$0xf]
        %v315 = vld [vmem:[%s3 + $0x3c] sm:$0xf]
        %v332 = vunpack.c.l.b16 %v300
        %v333 = vunpack.c.l.b16 %v301
        %v334 = vunpack.c.l.b16 %v302
        %v335 = vunpack.c.l.b16 %v303
        %v336 = vunpack.c.l.b16 %v304
        %v337 = vunpack.c.l.b16 %v305
        %v338 = vunpack.c.l.b16 %v306
        %v339 = vunpack.c.l.b16 %v307
        %v340 = vunpack.c.l.b16 %v308
        %v341 = vunpack.c.l.b16 %v309
        %v342 = vunpack.c.l.b16 %v310
        %v343 = vunpack.c.l.b16 %v311
        %v344 = vunpack.c.l.b16 %v312
        %v345 = vunpack.c.l.b16 %v313
        %v346 = vunpack.c.l.b16 %v314
        %v347 = vunpack.c.l.b16 %v315
        %v348 = vpack.c.b16 %v333, %v332
        %v349 = vpack.c.b16 %v335, %v334
        %v350 = vpack.c.b16 %v337, %v336
        %v351 = vpack.c.b16 %v339, %v338
        %v352 = vpack.c.b16 %v341, %v340
        %v353 = vpack.c.b16 %v343, %v342
        %v354 = vpack.c.b16 %v345, %v344
        %v355 = vpack.c.b16 %v347, %v346
        %364 = vmatprep.subr.bf16.mxu0 0
        %365 = vmatpush1.bf16.msra.mxu0 %v348
        %366 = vmatprep.subr.bf16.mxu0 0
        %367 = vmatpush1.bf16.msra.mxu0 %v349
        %368 = vmatprep.subr.bf16.mxu0 0
        %369 = vmatpush1.bf16.msra.mxu0 %v350
        %370 = vmatprep.subr.bf16.mxu0 0
        %371 = vmatpush1.bf16.msra.mxu0 %v351
        %372 = vmatprep.subr.bf16.mxu0 0
        %373 = vmatpush1.bf16.msra.mxu0 %v352
        %374 = vmatprep.subr.bf16.mxu0 0
        %375 = vmatpush1.bf16.msra.mxu0 %v353
        %376 = vmatprep.subr.bf16.mxu0 0
        %377 = vmatpush1.bf16.msra.mxu0 %v354
        %378 = vmatprep.subr.bf16.mxu0 0
        %379 = vmatpush1.bf16.msra.mxu0 %v355
        %380 = vmatprep.subr.bf16.mxu0 0
        %381 = vmatpush1.bf16.msra.mxu0 0
        %382 = vmatprep.subr.bf16.mxu0 0
        %383 = vmatpush1.bf16.msra.mxu0 0
        %384 = vmatprep.subr.bf16.mxu0 0
        %385 = vmatpush1.bf16.msra.mxu0 0
        %386 = vmatprep.subr.bf16.mxu0 0
        %387 = vmatpush1.bf16.msra.mxu0 0
        %388 = vmatprep.subr.bf16.mxu0 0
        %389 = vmatpush1.bf16.msra.mxu0 0
        %390 = vmatprep.subr.bf16.mxu0 0
        %391 = vmatpush1.bf16.msra.mxu0 0
        %392 = vmatprep.subr.bf16.mxu0 0
        %393 = vmatpush1.bf16.msra.mxu0 0
        %394 = vmatprep.subr.bf16.mxu0 0
        %395 = vmatpush1.bf16.msra.mxu0 0
        %396 = vmatprep.mubr.bf16.mxu0 0
        %397 = vmatmul.mubr.bf16.gmra.mrb[0].mxu0 %v299
        %v398 = vpop.f32.mrb[0].mxu0
        %v399 = vadd.f32 0.0, %v398
        %v400 = vpop.f32.mrb[0].mxu0
        %v401 = vpop.f32.mrb[0].mxu0
        %v402 = vpop.f32.mrb[0].mxu0
        %403 = vdwg.mxu0
        %404 = vst.msk [vmem:[#allocation2] sm:$0xff] %vm246, %v399
        %v405 = vld [vmem:[#allocation2] sm:$0xff]
        %v406 = vld [vmem:[%s4] sm:$0x1]
        %v408 = vlaneseq
        %v409 = vshrl.u32 %v408, 7
        %v410 = vsub.s32 0, %v409
        %v411 = vrot.slane %v406, %v410
        %v413 = vadd.f32 %v405, %v411
        %414 = vst.msk [vmem:[%s215] sm:$0xff] %vm246, %v413
        %s415 = sand.u32 %s137, 1
        %s416 = scalar_lea.sflag [#allocation4], %s415
        %s417 = sand.u32 %s137, 1
        %s418 = smul.addr %s417, 8
        %s419 = scalar_lea.vmem [#allocation3], %s418
        // Predicated region
        $region41: #{bert_mlp.1} parent=39 // pred_check
          %p420 = pneg %p147
        $region42: #{bert_mlp.1} parent=39 // pred_check_branch
          %422 = sbr.rel (%p420) target = $region44
        $region43: #{bert_mlp.1} parent=39 // pred_region
          %s424 = ssub.s32 128, 128
          %425 = vsyncadd %s416, %s424
          %s426 = smul.addr %s19, 128
          %s427 = scalar_lea.hbm %s5, %s426
          %s429 = sshll.u32 %s419, 4
          %s430 = int_to_ptr.vmem [resolvable:$true] %s429
          %432 = dma.vmem_to_hbm [thread:$0]  %s430, 128, %s427, %s416
        $region44: #{bert_mlp.1} parent=39 // pred_fallthru
          _
      $region40: #{bert_mlp.1} parent=5 // pred_fallthru
        _
      %p433 = scmp.le.s32.totalorder 2, %s14
      // Predicated region
      $region45: #{bert_mlp.1} parent=5 // pred_check
        %p434 = pneg %p433
      $region46: #{bert_mlp.1} parent=5 // pred_check_branch
        %436 = sbr.rel (%p434) target = $region48
      $region47: #{bert_mlp.1} parent=5 // pred_region
        %s437 = ssub.s32 %s14, 2
        // Predicated region
        $region49: #{bert_mlp.1} parent=47 // pred_check
          %p438 = pneg %p153
        $region50: #{bert_mlp.1} parent=47 // pred_check_branch
          %440 = sbr.rel (%p438) target = $region52
        $region51: #{bert_mlp.1} parent=47 // pred_region
          %s441 = sand.u32 %s138, 1
          %s442 = scalar_lea.sflag [#allocation4], %s441
          %s443 = sand.u32 %s138, 1
          %s444 = smul.addr %s443, 8
          %s445 = scalar_lea.vmem [#allocation3], %s444
          %446 = dma.done %s442, 128
        $region52: #{bert_mlp.1} parent=47 // pred_fallthru
          _
      $region48: #{bert_mlp.1} parent=5 // pred_fallthru
        _
    $region6: #{bert_mlp.1} parent=1 // loop_footer
      %s18 = sadd.s32 1, %s14
    $region7: #{bert_mlp.1} parent=1 // loop_footer_branch
      %13 = sbr.rel target = $region3
    $region8: #{bert_mlp.1} parent=1 // loop_exit
      _
    %447 = vsyncpa [#allocation4], 1
    %s448 = scalar_lea.sflag [#allocation4], 1
    %449 = vsyncpa %s448, 1

</llo_original>
